<compile_context>
chip_gen: v6e
topology: v6e:2x2x1
jax: 0.10.0
libtpu: 0.0.40
codegen_flags: <defaults>
</compile_context>

<pallas_src>
import math

import jax
import jax.numpy as jnp
from jax.experimental import pallas as pl
from jax.experimental.pallas import tpu as pltpu

BN_EPS = 1e-5
LANE = 128      # lane padding for hidden/output feature dims
SUBLANE = 8     # row padding for dense f32 stores


def _round_up(x, m):
    return ((x + m - 1) // m) * m


def _full_spec(shape):
    # Whole array as a single block (block_shape == array shape -> full-extent
    # exception to the (8,128) rule). No grid -> 0-arg index_map.
    return pl.BlockSpec(shape, lambda: tuple(0 for _ in shape))


# ----------------------------- Fused Pallas kernel -------------------------- #

def _make_fused_mlp_kernel(num_layers, m_true, m_pad):
    """One (m_pad, *) block: all layers fused, activations stay in VMEM."""
    inv_m = 1.0 / float(m_true)
    needs_mask = (m_pad != m_true)

    def kernel(*refs):
        # refs layout:
        #   x_ref,
        #   (w, gamma, beta) for each of the (num_layers-1) hidden layers,
        #   (w, b) for the final layer,
        #   o_ref
        x_ref = refs[0]
        o_ref = refs[-1]
        layer_refs = refs[1:-1]

        if needs_mask:
            # Exclude zero-padded rows from BN statistics (exact for any B*N).
            row = jax.lax.broadcasted_iota(jnp.int32, (m_pad, 1), 0)
            row_mask = (row < m_true).astype(jnp.float32)

        h = x_ref[...].astype(jnp.bfloat16)   # bf16 matmul operands
        idx = 0
        for _ in range(num_layers - 1):
            w_ref, g_ref, beta_ref = layer_refs[idx:idx + 3]
            idx += 3
            # Linear (bias dropped: cancelled by BN mean subtraction).
            # bf16 x bf16 -> f32 accumulation on the MXU.
            y = jnp.dot(h, w_ref[...], preferred_element_type=jnp.float32)

            # BatchNorm1d (training), two-pass stats in f32 (matches reference,
            # no E[y^2]-E[y]^2 cancellation).
            ym = y * row_mask if needs_mask else y
            mean = jnp.sum(ym, axis=0, keepdims=True) * inv_m
            yc = y - mean
            sq = yc * yc
            if needs_mask:
                sq = sq * row_mask
            var = jnp.sum(sq, axis=0, keepdims=True) * inv_m      # biased var
            scale = g_ref[...] * jax.lax.rsqrt(var + BN_EPS)      # gamma folded
            y = jnp.maximum(yc * scale + beta_ref[...], 0.0)      # BN + ReLU
            h = y.astype(jnp.bfloat16)

        # Final layer: bias, no BN, no ReLU. Lane-dense padded store.
        w_ref, b_ref = layer_refs[idx:idx + 2]
        y = jnp.dot(h, w_ref[...], preferred_element_type=jnp.float32)
        o_ref[...] = (y + b_ref[...]).astype(o_ref.dtype)

    return kernel


# ------------------------------ Parameters ---------------------------------- #

def init_mlp_params(key, input_dim, hidden_dim, output_dim, num_layers):
    """nn.Linear-style init (U(-1/sqrt(fan_in), +)); returns:
       params      : lane-padded, bf16-weight, kernel-ready tensors
                     hidden layers: (W, gamma, beta)   [bias dropped: BN cancels it]
                     final layer  : (W, b)
       params_ref  : unpadded f32 tensors for the pure-JAX reference
    """
    h = [hidden_dim] * (num_layers - 1)
    in_dims = [input_dim] + h
    out_dims = h + [output_dim]

    params, params_ref = [], []
    for li, (n_in, n_out) in enumerate(zip(in_dims, out_dims)):
        key, kw, kb = jax.random.split(key, 3)
        bound = 1.0 / math.sqrt(n_in)
        # stored already transposed: (in, out) so the kernel does x @ W
        w = jax.random.uniform(kw, (n_in, n_out), jnp.float32, -bound, bound)
        b = jax.random.uniform(kb, (1, n_out), jnp.float32, -bound, bound)
        gamma = jnp.ones((1, n_out), jnp.float32)
        beta = jnp.zeros((1, n_out), jnp.float32)
        params_ref.append((w, b, gamma, beta))

        # Lane-pad the output feature dim to 128. The first layer keeps its TRUE
        # contraction dim (= input D), so x is DMA'd unpadded from HBM; later
        # layers pad the contraction dim too (their input is the padded hidden).
        # Padded weight rows/cols are zero, so padded lanes stay exactly zero.
        n_out_p = _round_up(n_out, LANE)
        n_in_p = n_in if li == 0 else _round_up(n_in, LANE)
        w_p = jnp.zeros((n_in_p, n_out_p), jnp.float32).at[:n_in, :n_out].set(w)
        if li < num_layers - 1:
            g_p = jnp.zeros((1, n_out_p), jnp.float32).at[:, :n_out].set(gamma)
            bt_p = jnp.zeros((1, n_out_p), jnp.float32).at[:, :n_out].set(beta)
            params.append((w_p.astype(jnp.bfloat16), g_p, bt_p))
        else:
            b_p = jnp.zeros((1, n_out_p), jnp.float32).at[:, :n_out].set(b)
            params.append((w_p.astype(jnp.bfloat16), b_p))
    return params, params_ref


# ------------------------------- Forward ------------------------------------- #

def mlp_forward(x, params, output_dim, num_layers):
    B, N, D = x.shape
    M = B * N
    m_pad = _round_up(M, SUBLANE)
    out_pad = params[-1][0].shape[1]

    x2 = x.reshape(M, D)
    if m_pad != M:
        x2 = jnp.pad(x2, ((0, m_pad - M), (0, 0)))   # rows only; lanes stay = D

    flat_args = [x2]
    in_specs = [_full_spec(x2.shape)]
    for layer in params:
        for a in layer:
            flat_args.append(a)
            in_specs.append(_full_spec(a.shape))

    out = pl.pallas_call(
        _make_fused_mlp_kernel(num_layers, M, m_pad),
        out_shape=jax.ShapeDtypeStruct((m_pad, out_pad), jnp.float32),
        in_specs=in_specs,
        out_specs=_full_spec((m_pad, out_pad)),
        compiler_params=pltpu.CompilerParams(
            # 48 MiB: > the conservative 32 MiB scoped default on v5e/v6e
            # (128 MiB physical) while leaving headroom on v7x (64 MiB per TC).
            vmem_limit_bytes=48 * 1024 * 1024),
    )(*flat_args)

    return out[:M, :output_dim].reshape(B, N, output_dim)


# Pure-JAX reference (original module semantics, incl. hidden-layer bias) with
# matching (bf16-operand, f32-accumulate) matmul math.
def mlp_reference(x, params_ref, output_dim, num_layers):
    B, N, D = x.shape
    h = x.reshape(B * N, D)
    for i, (w, b, gamma, beta) in enumerate(params_ref):
        y = jnp.dot(h.astype(jnp.bfloat16), w.astype(jnp.bfloat16),
                    preferred_element_type=jnp.float32) + b
        if i < num_layers - 1:
            mean = jnp.mean(y, axis=0, keepdims=True)
            var = jnp.mean((y - mean) ** 2, axis=0, keepdims=True)  # biased
            y = (y - mean) * jax.lax.rsqrt(var + BN_EPS) * gamma + beta
            y = jnp.maximum(y, 0.0)
        h = y
    return h.reshape(B, N, output_dim)


if __name__ == "__main__":
    B, N = 2, 8
    input_dim, hidden_dim, output_dim, num_layers = 16, 32, 8, 3

    key = jax.random.PRNGKey(0)
    key, kx = jax.random.split(key)
    x = jax.random.normal(kx, (B, N, input_dim), jnp.float32)

    params, params_ref = init_mlp_params(
        key, input_dim, hidden_dim, output_dim, num_layers)

    out = mlp_forward(x, params, output_dim, num_layers)
    out = jax.block_until_ready(out)

    ref = mlp_reference(x, params_ref, output_dim, num_layers)
    assert out.shape == (B, N, output_dim)
    assert jnp.allclose(out, ref, atol=5e-3, rtol=5e-3), \
        float(jnp.max(jnp.abs(out - ref)))

    # TODO(synk): BatchNorm1d running_mean/running_var updates (training-mode side
    # effect) are not materialized; only the forward output is produced.
    print("KERNEL_OK")
</pallas_src>

<mosaic_0001>
module attributes {stable_mosaic.version = 11 : i64} {
  func.func @kernel(%arg0: memref<16x16xf32, #tpu.memory_space<vmem>>, %arg1: memref<16x128xbf16, #tpu.memory_space<vmem>>, %arg2: memref<1x128xf32, #tpu.memory_space<vmem>>, %arg3: memref<1x128xf32, #tpu.memory_space<vmem>>, %arg4: memref<128x128xbf16, #tpu.memory_space<vmem>>, %arg5: memref<1x128xf32, #tpu.memory_space<vmem>>, %arg6: memref<1x128xf32, #tpu.memory_space<vmem>>, %arg7: memref<128x128xbf16, #tpu.memory_space<vmem>>, %arg8: memref<1x128xf32, #tpu.memory_space<vmem>>, %arg9: memref<16x128xf32, #tpu.memory_space<vmem>>) attributes {dimension_semantics = [], scalar_prefetch = 0 : i64, scratch_operands = 0 : i64, tpu.core_type = #tpu.core_type<tc>} {
    %c0 = arith.constant 0 : index
    %c0_0 = arith.constant 0 : index
    %0 = vector.load %arg0[%c0, %c0_0] : memref<16x16xf32, #tpu.memory_space<vmem>>, vector<16x16xf32>
    %1 = arith.truncf %0 : vector<16x16xf32> to vector<16x16xbf16>
    %c0_1 = arith.constant 0 : index
    %c0_2 = arith.constant 0 : index
    %2 = vector.load %arg1[%c0_1, %c0_2] : memref<16x128xbf16, #tpu.memory_space<vmem>>, vector<16x128xbf16>
    %cst = arith.constant dense<0.000000e+00> : vector<16x128xf32>
    %3 = tpu.matmul %1, %2, %cst {dimension_numbers = #tpu.dot_dimension_numbers<[1], [0], [0], [1], [0, 0, 1, 1], [], []>} : vector<16x16xbf16>, vector<16x128xbf16>, vector<16x128xf32> -> vector<16x128xf32>
    %cst_3 = arith.constant dense<0.000000e+00> : vector<128xf32>
    %4 = vector.multi_reduction <add>, %3, %cst_3 [0] : vector<16x128xf32> to vector<128xf32>
    %5 = vector.shape_cast %4 : vector<128xf32> to vector<1x128xf32>
    %cst_4 = arith.constant 6.250000e-02 : f32
    %6 = vector.broadcast %cst_4 : f32 to vector<1x128xf32>
    %7 = arith.mulf %5, %6 : vector<1x128xf32>
    %8 = vector.broadcast %7 : vector<1x128xf32> to vector<16x128xf32>
    %9 = arith.subf %3, %8 : vector<16x128xf32>
    %10 = arith.mulf %9, %9 : vector<16x128xf32>
    %cst_5 = arith.constant dense<0.000000e+00> : vector<128xf32>
    %11 = vector.multi_reduction <add>, %10, %cst_5 [0] : vector<16x128xf32> to vector<128xf32>
    %12 = vector.shape_cast %11 : vector<128xf32> to vector<1x128xf32>
    %cst_6 = arith.constant 6.250000e-02 : f32
    %13 = vector.broadcast %cst_6 : f32 to vector<1x128xf32>
    %14 = arith.mulf %12, %13 : vector<1x128xf32>
    %c0_7 = arith.constant 0 : index
    %c0_8 = arith.constant 0 : index
    %15 = vector.load %arg2[%c0_7, %c0_8] : memref<1x128xf32, #tpu.memory_space<vmem>>, vector<1x128xf32>
    %cst_9 = arith.constant 9.99999974E-6 : f32
    %16 = vector.broadcast %cst_9 : f32 to vector<1x128xf32>
    %17 = arith.addf %14, %16 : vector<1x128xf32>
    %18 = math.rsqrt %17 : vector<1x128xf32>
    %19 = arith.mulf %15, %18 : vector<1x128xf32>
    %20 = vector.broadcast %19 : vector<1x128xf32> to vector<16x128xf32>
    %21 = arith.mulf %9, %20 : vector<16x128xf32>
    %c0_10 = arith.constant 0 : index
    %c0_11 = arith.constant 0 : index
    %22 = vector.load %arg3[%c0_10, %c0_11] : memref<1x128xf32, #tpu.memory_space<vmem>>, vector<1x128xf32>
    %23 = vector.broadcast %22 : vector<1x128xf32> to vector<16x128xf32>
    %24 = arith.addf %21, %23 : vector<16x128xf32>
    %cst_12 = arith.constant 0.000000e+00 : f32
    %25 = vector.broadcast %cst_12 : f32 to vector<16x128xf32>
    %26 = arith.maximumf %24, %25 : vector<16x128xf32>
    %27 = arith.truncf %26 : vector<16x128xf32> to vector<16x128xbf16>
    %c0_13 = arith.constant 0 : index
    %c0_14 = arith.constant 0 : index
    %28 = vector.load %arg4[%c0_13, %c0_14] : memref<128x128xbf16, #tpu.memory_space<vmem>>, vector<128x128xbf16>
    %cst_15 = arith.constant dense<0.000000e+00> : vector<16x128xf32>
    %29 = tpu.matmul %27, %28, %cst_15 {dimension_numbers = #tpu.dot_dimension_numbers<[1], [0], [0], [1], [0, 0, 1, 1], [], []>} : vector<16x128xbf16>, vector<128x128xbf16>, vector<16x128xf32> -> vector<16x128xf32>
    %cst_16 = arith.constant dense<0.000000e+00> : vector<128xf32>
    %30 = vector.multi_reduction <add>, %29, %cst_16 [0] : vector<16x128xf32> to vector<128xf32>
    %31 = vector.shape_cast %30 : vector<128xf32> to vector<1x128xf32>
    %cst_17 = arith.constant 6.250000e-02 : f32
    %32 = vector.broadcast %cst_17 : f32 to vector<1x128xf32>
    %33 = arith.mulf %31, %32 : vector<1x128xf32>
    %34 = vector.broadcast %33 : vector<1x128xf32> to vector<16x128xf32>
    %35 = arith.subf %29, %34 : vector<16x128xf32>
    %36 = arith.mulf %35, %35 : vector<16x128xf32>
    %cst_18 = arith.constant dense<0.000000e+00> : vector<128xf32>
    %37 = vector.multi_reduction <add>, %36, %cst_18 [0] : vector<16x128xf32> to vector<128xf32>
    %38 = vector.shape_cast %37 : vector<128xf32> to vector<1x128xf32>
    %cst_19 = arith.constant 6.250000e-02 : f32
    %39 = vector.broadcast %cst_19 : f32 to vector<1x128xf32>
    %40 = arith.mulf %38, %39 : vector<1x128xf32>
    %c0_20 = arith.constant 0 : index
    %c0_21 = arith.constant 0 : index
    %41 = vector.load %arg5[%c0_20, %c0_21] : memref<1x128xf32, #tpu.memory_space<vmem>>, vector<1x128xf32>
    %cst_22 = arith.constant 9.99999974E-6 : f32
    %42 = vector.broadcast %cst_22 : f32 to vector<1x128xf32>
    %43 = arith.addf %40, %42 : vector<1x128xf32>
    %44 = math.rsqrt %43 : vector<1x128xf32>
    %45 = arith.mulf %41, %44 : vector<1x128xf32>
    %46 = vector.broadcast %45 : vector<1x128xf32> to vector<16x128xf32>
    %47 = arith.mulf %35, %46 : vector<16x128xf32>
    %c0_23 = arith.constant 0 : index
    %c0_24 = arith.constant 0 : index
    %48 = vector.load %arg6[%c0_23, %c0_24] : memref<1x128xf32, #tpu.memory_space<vmem>>, vector<1x128xf32>
    %49 = vector.broadcast %48 : vector<1x128xf32> to vector<16x128xf32>
    %50 = arith.addf %47, %49 : vector<16x128xf32>
    %cst_25 = arith.constant 0.000000e+00 : f32
    %51 = vector.broadcast %cst_25 : f32 to vector<16x128xf32>
    %52 = arith.maximumf %50, %51 : vector<16x128xf32>
    %53 = arith.truncf %52 : vector<16x128xf32> to vector<16x128xbf16>
    %c0_26 = arith.constant 0 : index
    %c0_27 = arith.constant 0 : index
    %54 = vector.load %arg7[%c0_26, %c0_27] : memref<128x128xbf16, #tpu.memory_space<vmem>>, vector<128x128xbf16>
    %cst_28 = arith.constant dense<0.000000e+00> : vector<16x128xf32>
    %55 = tpu.matmul %53, %54, %cst_28 {dimension_numbers = #tpu.dot_dimension_numbers<[1], [0], [0], [1], [0, 0, 1, 1], [], []>} : vector<16x128xbf16>, vector<128x128xbf16>, vector<16x128xf32> -> vector<16x128xf32>
    %c0_29 = arith.constant 0 : index
    %c0_30 = arith.constant 0 : index
    %56 = vector.load %arg8[%c0_29, %c0_30] : memref<1x128xf32, #tpu.memory_space<vmem>>, vector<1x128xf32>
    %57 = vector.broadcast %56 : vector<1x128xf32> to vector<16x128xf32>
    %58 = arith.addf %55, %57 : vector<16x128xf32>
    %c0_31 = arith.constant 0 : index
    %c0_32 = arith.constant 0 : index
    %59 = vector.load %arg9[%c0_31, %c0_32] : memref<16x128xf32, #tpu.memory_space<vmem>>, vector<16x128xf32>
    tpu.vector_store %arg9[%c0_31, %c0_32], %58 {strides = array<i32>} : memref<16x128xf32, #tpu.memory_space<vmem>>, vector<16x128xf32>,
    return
  }
}

</mosaic_0001>

<llo_original>
// kernel: tpu_custom_call.1
$region0: #{tpu_custom_call.1}
  #allocation0 [shape = 'u32[]', space=smem, size = 0x4, offset = 0x4, fixed_abs, tag = 'smem constant byte address 0x4 - core index']
  #allocation1 [shape = 'u32[144,128]{1,0:T(1,128)}', space=vmem, size = 0x12000, scoped, tag = 'internal scratch']
  %s0 = inlined_call_operand.hbm [shape: f32[16,16], index: 0, kind: input, shape index: {}]
  %s1 = inlined_call_operand.hbm [shape: bf16[16,128], index: 1, kind: input, shape index: {}]
  %s2 = inlined_call_operand.vmem [shape: f32[1,128], index: 2, kind: input, shape index: {}]
  %s3 = inlined_call_operand.vmem [shape: f32[1,128], index: 3, kind: input, shape index: {}]
  %s4 = inlined_call_operand.hbm [shape: bf16[128,128], index: 4, kind: input, shape index: {}]
  %s5 = inlined_call_operand.vmem [shape: f32[1,128], index: 5, kind: input, shape index: {}]
  %s6 = inlined_call_operand.vmem [shape: f32[1,128], index: 6, kind: input, shape index: {}]
  %s7 = inlined_call_operand.hbm [shape: bf16[128,128], index: 7, kind: input, shape index: {}]
  %s8 = inlined_call_operand.vmem [shape: f32[1,128], index: 8, kind: input, shape index: {}]
  %s9 = inlined_call_operand.hbm [shape: f32[16,128], index: 9, kind: output, shape index: {}]
  %s10 = sld [smem:[#allocation0]]
  $region62: #{tpu_custom_call.1} parent=0
    _
  %s12 = ssub.s32 1, %s10
  %s13 = scalar_select 0, %s12, %s10
  $region1: #{tpu_custom_call.1} parent=0
    #allocation2 [shape = 'u8[8192]{0}', space=vmem, size = 0x2000, scoped, tag = 'input window, operand 0, single buffered']
    #allocation3 [shape = 's32[1]{0}', space=sflag, size = 0x4, scoped, tag = 'scoped memory for tpu_custom_call.1']
    #allocation4 [shape = 's32[1]{0}', space=sflag, size = 0x4, scoped, tag = 'scoped memory for tpu_custom_call.1']
    #allocation5 [shape = 'u8[4096]{0}', space=vmem, size = 0x1000, scoped, tag = 'input window, operand 1, single buffered']
    #allocation6 [shape = 's32[1]{0}', space=sflag, size = 0x4, scoped, tag = 'scoped memory for tpu_custom_call.1']
    #allocation7 [shape = 'u8[32768]{0}', space=vmem, size = 0x8000, scoped, tag = 'input window, operand 4, single buffered']
    #allocation8 [shape = 'u8[32768]{0}', space=vmem, size = 0x8000, scoped, tag = 'input window, operand 7, single buffered']
    #allocation9 [shape = 's32[1]{0}', space=sflag, size = 0x4, scoped, tag = 'scoped memory for tpu_custom_call.1']
    #allocation10 [shape = 'u8[8192]{0}', space=vmem, size = 0x2000, scoped, tag = 'output window, operand 0, single buffered']
    %14 = vsyncpa [#allocation3], 0
    %15 = vsyncpa [#allocation6], 0
    %16 = vsyncpa [#allocation9], 0
    %17 = vsyncpa [#allocation4], 0
    // Predicated region
    $region2: #{tpu_custom_call.1} parent=1 // pred_check
      _
    $region3: #{tpu_custom_call.1} parent=1 // pred_check_branch
      %19 = sbr.rel (0) target = $region5
    $region4: #{tpu_custom_call.1} parent=1 // pred_region
      %s21 = ssub.s32 256, 256
      %22 = vsyncadd [#allocation3], %s21
      %s23 = sshll.u32 [#allocation2], 4
      %s24 = int_to_ptr.vmem [resolvable:$true] %s23
      %29 = dma.hbm_to_vmem [thread:$0]  %s0, 256, %s24, [#allocation3], 128, 128, 8
    $region5: #{tpu_custom_call.1} parent=1 // pred_fallthru
      _
    // Predicated region
    $region6: #{tpu_custom_call.1} parent=1 // pred_check
      _
    $region7: #{tpu_custom_call.1} parent=1 // pred_check_branch
      %31 = sbr.rel (0) target = $region9
    $region8: #{tpu_custom_call.1} parent=1 // pred_region
      %s33 = ssub.s32 128, 128
      %34 = vsyncadd [#allocation6], %s33
      %s35 = sshll.u32 [#allocation5], 4
      %s36 = int_to_ptr.vmem [resolvable:$true] %s35
      %41 = dma.hbm_to_vmem [thread:$0]  %s1, 128, %s36, [#allocation6], 64, 64, 4
    $region9: #{tpu_custom_call.1} parent=1 // pred_fallthru
      _
    // Predicated region
    $region10: #{tpu_custom_call.1} parent=1 // pred_check
      _
    $region11: #{tpu_custom_call.1} parent=1 // pred_check_branch
      %43 = sbr.rel (0) target = $region13
    $region12: #{tpu_custom_call.1} parent=1 // pred_region
      _
    $region13: #{tpu_custom_call.1} parent=1 // pred_fallthru
      _
    // Predicated region
    $region14: #{tpu_custom_call.1} parent=1 // pred_check
      _
    $region15: #{tpu_custom_call.1} parent=1 // pred_check_branch
      %45 = sbr.rel (0) target = $region17
    $region16: #{tpu_custom_call.1} parent=1 // pred_region
      _
    $region17: #{tpu_custom_call.1} parent=1 // pred_fallthru
      _
    // Predicated region
    $region18: #{tpu_custom_call.1} parent=1 // pred_check
      _
    $region19: #{tpu_custom_call.1} parent=1 // pred_check_branch
      %47 = sbr.rel (0) target = $region21
    $region20: #{tpu_custom_call.1} parent=1 // pred_region
      %s49 = ssub.s32 1024, 1024
      %50 = vsyncadd [#allocation6], %s49
      %s51 = sshll.u32 [#allocation7], 4
      %s52 = int_to_ptr.vmem [resolvable:$true] %s51
      %57 = dma.hbm_to_vmem [thread:$0]  %s4, 1024, %s52, [#allocation6], 64, 64, 4
    $region21: #{tpu_custom_call.1} parent=1 // pred_fallthru
      _
    // Predicated region
    $region22: #{tpu_custom_call.1} parent=1 // pred_check
      _
    $region23: #{tpu_custom_call.1} parent=1 // pred_check_branch
      %59 = sbr.rel (0) target = $region25
    $region24: #{tpu_custom_call.1} parent=1 // pred_region
      _
    $region25: #{tpu_custom_call.1} parent=1 // pred_fallthru
      _
    // Predicated region
    $region26: #{tpu_custom_call.1} parent=1 // pred_check
      _
    $region27: #{tpu_custom_call.1} parent=1 // pred_check_branch
      %61 = sbr.rel (0) target = $region29
    $region28: #{tpu_custom_call.1} parent=1 // pred_region
      _
    $region29: #{tpu_custom_call.1} parent=1 // pred_fallthru
      _
    // Predicated region
    $region30: #{tpu_custom_call.1} parent=1 // pred_check
      _
    $region31: #{tpu_custom_call.1} parent=1 // pred_check_branch
      %63 = sbr.rel (0) target = $region33
    $region32: #{tpu_custom_call.1} parent=1 // pred_region
      %s65 = ssub.s32 1024, 1024
      %66 = vsyncadd [#allocation9], %s65
      %s67 = sshll.u32 [#allocation8], 4
      %s68 = int_to_ptr.vmem [resolvable:$true] %s67
      %73 = dma.hbm_to_vmem [thread:$0]  %s7, 1024, %s68, [#allocation9], 64, 64, 4
    $region33: #{tpu_custom_call.1} parent=1 // pred_fallthru
      _
    // Predicated region
    $region34: #{tpu_custom_call.1} parent=1 // pred_check
      _
    $region35: #{tpu_custom_call.1} parent=1 // pred_check_branch
      %75 = sbr.rel (0) target = $region37
    $region36: #{tpu_custom_call.1} parent=1 // pred_region
      _
    $region37: #{tpu_custom_call.1} parent=1 // pred_fallthru
      _
    // Predicated region
    $region38: #{tpu_custom_call.1} parent=1 // pred_check
      _
    $region39: #{tpu_custom_call.1} parent=1 // pred_check_branch
      %77 = sbr.rel (0) target = $region41
    $region40: #{tpu_custom_call.1} parent=1 // pred_region
      %78 = dma.done [#allocation3], 256
    $region41: #{tpu_custom_call.1} parent=1 // pred_fallthru
      _
    // Predicated region
    $region42: #{tpu_custom_call.1} parent=1 // pred_check
      _
    $region43: #{tpu_custom_call.1} parent=1 // pred_check_branch
      %80 = sbr.rel (0) target = $region45
    $region44: #{tpu_custom_call.1} parent=1 // pred_region
      %81 = dma.done [#allocation6], 128
    $region45: #{tpu_custom_call.1} parent=1 // pred_fallthru
      _
    // Predicated region
    $region46: #{tpu_custom_call.1} parent=1 // pred_check
      _
    $region47: #{tpu_custom_call.1} parent=1 // pred_check_branch
      %83 = sbr.rel (0) target = $region49
    $region48: #{tpu_custom_call.1} parent=1 // pred_region
      %84 = dma.done [#allocation6], 1024
    $region49: #{tpu_custom_call.1} parent=1 // pred_fallthru
      _
    // Predicated region
    $region50: #{tpu_custom_call.1} parent=1 // pred_check
      _
    $region51: #{tpu_custom_call.1} parent=1 // pred_check_branch
      %86 = sbr.rel (0) target = $region53
    $region52: #{tpu_custom_call.1} parent=1 // pred_region
      %87 = dma.done [#allocation9], 1024
    $region53: #{tpu_custom_call.1} parent=1 // pred_fallthru
      _
    %v89 = vld [vmem:[#allocation2] sm:$0xff]
    %v90 = vld [vmem:[#allocation2 + $0x8] sm:$0xff]
    %v91 = vpack.c.bf16 %v90, %v89
    %v92 = vld [vmem:[#allocation5] sm:$0xf]
    %v93 = vld [vmem:[#allocation5 + $0x4] sm:$0xf]
    %v96 = vunpack.c.l.b16 %v92
    %v97 = vunpack.c.l.b16 %v93
    %v98 = vpack.c.b16 %v97, %v96
    %vm100 = vcmask 130048
    %v102 = vsel %vm100, %v91, 0
    %104 = vmatprep.subr.bf16.mxu0 0
    %105 = vmatpush1.bf16.msra.mxu0 0
    %106 = vmatprep.subr.bf16.mxu0 0
    %107 = vmatpush1.bf16.msra.mxu0 0
    %108 = vmatprep.subr.bf16.mxu0 0
    %109 = vmatpush1.bf16.msra.mxu0 0
    %110 = vmatprep.subr.bf16.mxu0 0
    %111 = vmatpush1.bf16.msra.mxu0 0
    %112 = vmatprep.subr.bf16.mxu0 0
    %113 = vmatpush1.bf16.msra.mxu0 0
    %114 = vmatprep.subr.bf16.mxu0 0
    %115 = vmatpush1.bf16.msra.mxu0 0
    %116 = vmatprep.subr.bf16.mxu0 0
    %117 = vmatpush1.bf16.msra.mxu0 0
    %118 = vmatprep.subr.bf16.mxu0 0
    %119 = vmatpush1.bf16.msra.mxu0 %v98
    %120 = vmatprep.subr.bf16.mxu0 0
    %121 = vmatpush2.bf16.msra.mxu0 0
    %122 = vmatprep.subr.bf16.mxu0 0
    %123 = vmatpush2.bf16.msra.mxu0 0
    %124 = vmatprep.subr.bf16.mxu0 0
    %125 = vmatpush2.bf16.msra.mxu0 0
    %126 = vmatprep.subr.bf16.mxu0 0
    %127 = vmatpush2.bf16.msra.mxu0 0
    %128 = vmatprep.subr.bf16.mxu0 0
    %129 = vmatpush2.bf16.msra.mxu0 0
    %130 = vmatprep.subr.bf16.mxu0 0
    %131 = vmatpush2.bf16.msra.mxu0 0
    %132 = vmatprep.subr.bf16.mxu0 0
    %133 = vmatpush2.bf16.msra.mxu0 0
    %134 = vmatprep.subr.bf16.mxu0 0
    %135 = vmatpush2.bf16.msra.mxu0 0
    %136 = vmatprep.mubr.bf16.mxu0 0
    %137 = vmatmul.mubr.bf16.gmra.mxu0 %v102
    %v138 = vpop.f32.mrf.mxu0
    %v139 = vadd.f32 0.0, %v138
    %v140 = vpop.f32.mrf.mxu0
    %v141 = vpop.f32.mrf.mxu0
    %v142 = vadd.f32 0.0, %v141
    %v143 = vpop.f32.mrf.mxu0
    %144 = vdwg.mxu0
    %v145 = vadd.f32 %v139, %v142
    %v146 = vrot.slane %v145, 4
    %v147 = vadd.f32 %v145, %v146
    %v148 = vrot.slane %v147, 2
    %v149 = vadd.f32 %v147, %v148
    %v150 = vrot.slane %v149, 1
    %v151 = vadd.f32 %v149, %v150
    %v152 = vmul.f32 %v151, 0.0625
    %v153 = vsub.f32 %v139, %v152
    %v154 = vsub.f32 %v142, %v152
    %v155 = vmul.f32 %v153, %v153
    %v156 = vmul.f32 %v154, %v154
    %v157 = vadd.f32 %v155, %v156
    %v158 = vrot.slane %v157, 4
    %v159 = vadd.f32 %v157, %v158
    %v160 = vrot.slane %v159, 2
    %v161 = vadd.f32 %v159, %v160
    %v162 = vrot.slane %v161, 1
    %v163 = vadd.f32 %v161, %v162
    %v164 = vmul.f32 %v163, 0.0625
    %v165 = vld [vmem:[%s2] sm:$0x1]
    %v166 = vadd.f32 %v164, 1e-05
    %v167 = vrsqrt.pop %v166
    %v168 = vmul.f32 %v165, %v167
    %v170 = vlaneseq
    %v171 = vshrl.u32 %v170, 7
    %v172 = vsub.s32 0, %v171
    %v173 = vrot.slane %v168, %v172
    %v175 = vmul.f32 %v153, %v173
    %v176 = vmul.f32 %v154, %v173
    %v177 = vld [vmem:[%s3] sm:$0x1]
    %v179 = vlaneseq
    %v180 = vshrl.u32 %v179, 7
    %v181 = vsub.s32 0, %v180
    %v182 = vrot.slane %v177, %v181
    %v184 = vadd.f32 %v175, %v182
    %v185 = vadd.f32 %v176, %v182
    %v186 = vmax.f32 %v184, 0.0
    %v187 = vmax.f32 %v185, 0.0
    %v188 = vpack.c.bf16 %v187, %v186
    %v189 = vld [vmem:[#allocation7] sm:$0xf]
    %v190 = vld [vmem:[#allocation7 + $0x4] sm:$0xf]
    %v191 = vld [vmem:[#allocation7 + $0x8] sm:$0xf]
    %v192 = vld [vmem:[#allocation7 + $0xc] sm:$0xf]
    %v193 = vld [vmem:[#allocation7 + $0x10] sm:$0xf]
    %v194 = vld [vmem:[#allocation7 + $0x14] sm:$0xf]
    %v195 = vld [vmem:[#allocation7 + $0x18] sm:$0xf]
    %v196 = vld [vmem:[#allocation7 + $0x1c] sm:$0xf]
    %v197 = vld [vmem:[#allocation7 + $0x20] sm:$0xf]
    %v198 = vld [vmem:[#allocation7 + $0x24] sm:$0xf]
    %v199 = vld [vmem:[#allocation7 + $0x28] sm:$0xf]
    %v200 = vld [vmem:[#allocation7 + $0x2c] sm:$0xf]
    %v201 = vld [vmem:[#allocation7 + $0x30] sm:$0xf]
    %v202 = vld [vmem:[#allocation7 + $0x34] sm:$0xf]
    %v203 = vld [vmem:[#allocation7 + $0x38] sm:$0xf]
    %v204 = vld [vmem:[#allocation7 + $0x3c] sm:$0xf]
    %v221 = vunpack.c.l.b16 %v189
    %v222 = vunpack.c.l.b16 %v190
    %v223 = vunpack.c.l.b16 %v191
    %v224 = vunpack.c.l.b16 %v192
    %v225 = vunpack.c.l.b16 %v193
    %v226 = vunpack.c.l.b16 %v194
    %v227 = vunpack.c.l.b16 %v195
    %v228 = vunpack.c.l.b16 %v196
    %v229 = vunpack.c.l.b16 %v197
    %v230 = vunpack.c.l.b16 %v198
    %v231 = vunpack.c.l.b16 %v199
    %v232 = vunpack.c.l.b16 %v200
    %v233 = vunpack.c.l.b16 %v201
    %v234 = vunpack.c.l.b16 %v202
    %v235 = vunpack.c.l.b16 %v203
    %v236 = vunpack.c.l.b16 %v204
    %v237 = vpack.c.b16 %v222, %v221
    %v238 = vpack.c.b16 %v224, %v223
    %v239 = vpack.c.b16 %v226, %v225
    %v240 = vpack.c.b16 %v228, %v227
    %v241 = vpack.c.b16 %v230, %v229
    %v242 = vpack.c.b16 %v232, %v231
    %v243 = vpack.c.b16 %v234, %v233
    %v244 = vpack.c.b16 %v236, %v235
    %253 = vmatprep.subr.bf16.mxu0 0
    %254 = vmatpush1.bf16.msra.mxu0 %v244
    %255 = vmatprep.subr.bf16.mxu0 0
    %256 = vmatpush1.bf16.msra.mxu0 %v243
    %257 = vmatprep.subr.bf16.mxu0 0
    %258 = vmatpush1.bf16.msra.mxu0 %v242
    %259 = vmatprep.subr.bf16.mxu0 0
    %260 = vmatpush1.bf16.msra.mxu0 %v241
    %261 = vmatprep.subr.bf16.mxu0 0
    %262 = vmatpush1.bf16.msra.mxu0 %v240
    %263 = vmatprep.subr.bf16.mxu0 0
    %264 = vmatpush1.bf16.msra.mxu0 %v239
    %265 = vmatprep.subr.bf16.mxu0 0
    %266 = vmatpush1.bf16.msra.mxu0 %v238
    %267 = vmatprep.subr.bf16.mxu0 0
    %268 = vmatpush1.bf16.msra.mxu0 %v237
    %269 = vmatprep.subr.bf16.mxu0 0
    %270 = vmatpush2.bf16.msra.mxu0 0
    %271 = vmatprep.subr.bf16.mxu0 0
    %272 = vmatpush2.bf16.msra.mxu0 0
    %273 = vmatprep.subr.bf16.mxu0 0
    %274 = vmatpush2.bf16.msra.mxu0 0
    %275 = vmatprep.subr.bf16.mxu0 0
    %276 = vmatpush2.bf16.msra.mxu0 0
    %277 = vmatprep.subr.bf16.mxu0 0
    %278 = vmatpush2.bf16.msra.mxu0 0
    %279 = vmatprep.subr.bf16.mxu0 0
    %280 = vmatpush2.bf16.msra.mxu0 0
    %281 = vmatprep.subr.bf16.mxu0 0
    %282 = vmatpush2.bf16.msra.mxu0 0
    %283 = vmatprep.subr.bf16.mxu0 0
    %284 = vmatpush2.bf16.msra.mxu0 0
    %285 = vmatprep.mubr.bf16.mxu0 0
    %286 = vmatmul.mubr.bf16.gmra.mxu0 %v188
    %v287 = vpop.f32.mrf.mxu0
    %v288 = vadd.f32 0.0, %v287
    %v289 = vpop.f32.mrf.mxu0
    %v290 = vpop.f32.mrf.mxu0
    %v291 = vadd.f32 0.0, %v290
    %v292 = vpop.f32.mrf.mxu0
    %293 = vdwg.mxu0
    %v294 = vadd.f32 %v288, %v291
    %v295 = vrot.slane %v294, 4
    %v296 = vadd.f32 %v294, %v295
    %v297 = vrot.slane %v296, 2
    %v298 = vadd.f32 %v296, %v297
    %v299 = vrot.slane %v298, 1
    %v300 = vadd.f32 %v298, %v299
    %v301 = vmul.f32 %v300, 0.0625
    %v302 = vsub.f32 %v288, %v301
    %v303 = vsub.f32 %v291, %v301
    %v304 = vmul.f32 %v302, %v302
    %v305 = vmul.f32 %v303, %v303
    %v306 = vadd.f32 %v304, %v305
    %v307 = vrot.slane %v306, 4
    %v308 = vadd.f32 %v306, %v307
    %v309 = vrot.slane %v308, 2
    %v310 = vadd.f32 %v308, %v309
    %v311 = vrot.slane %v310, 1
    %v312 = vadd.f32 %v310, %v311
    %v313 = vmul.f32 %v312, 0.0625
    %v314 = vld [vmem:[%s5] sm:$0x1]
    %v315 = vadd.f32 %v313, 1e-05
    %v316 = vrsqrt.pop %v315
    %v317 = vmul.f32 %v314, %v316
    %v319 = vlaneseq
    %v320 = vshrl.u32 %v319, 7
    %v321 = vsub.s32 0, %v320
    %v322 = vrot.slane %v317, %v321
    %v324 = vmul.f32 %v302, %v322
    %v325 = vmul.f32 %v303, %v322
    %v326 = vld [vmem:[%s6] sm:$0x1]
    %v328 = vlaneseq
    %v329 = vshrl.u32 %v328, 7
    %v330 = vsub.s32 0, %v329
    %v331 = vrot.slane %v326, %v330
    %v333 = vadd.f32 %v324, %v331
    %v334 = vadd.f32 %v325, %v331
    %v335 = vmax.f32 %v333, 0.0
    %v336 = vmax.f32 %v334, 0.0
    %v337 = vpack.c.bf16 %v336, %v335
    %v338 = vld [vmem:[#allocation8] sm:$0xf]
    %v339 = vld [vmem:[#allocation8 + $0x4] sm:$0xf]
    %v340 = vld [vmem:[#allocation8 + $0x8] sm:$0xf]
    %v341 = vld [vmem:[#allocation8 + $0xc] sm:$0xf]
    %v342 = vld [vmem:[#allocation8 + $0x10] sm:$0xf]
    %v343 = vld [vmem:[#allocation8 + $0x14] sm:$0xf]
    %v344 = vld [vmem:[#allocation8 + $0x18] sm:$0xf]
    %v345 = vld [vmem:[#allocation8 + $0x1c] sm:$0xf]
    %v346 = vld [vmem:[#allocation8 + $0x20] sm:$0xf]
    %v347 = vld [vmem:[#allocation8 + $0x24] sm:$0xf]
    %v348 = vld [vmem:[#allocation8 + $0x28] sm:$0xf]
    %v349 = vld [vmem:[#allocation8 + $0x2c] sm:$0xf]
    %v350 = vld [vmem:[#allocation8 + $0x30] sm:$0xf]
    %v351 = vld [vmem:[#allocation8 + $0x34] sm:$0xf]
    %v352 = vld [vmem:[#allocation8 + $0x38] sm:$0xf]
    %v353 = vld [vmem:[#allocation8 + $0x3c] sm:$0xf]
    %v354 = vld [vmem:[%s8] sm:$0x1]
    %v356 = vlaneseq
    %v357 = vshrl.u32 %v356, 7
    %v358 = vsub.s32 0, %v357
    %v359 = vrot.slane %v354, %v358
    %v377 = vunpack.c.l.b16 %v338
    %v378 = vunpack.c.l.b16 %v339
    %v379 = vunpack.c.l.b16 %v340
    %v380 = vunpack.c.l.b16 %v341
    %v381 = vunpack.c.l.b16 %v342
    %v382 = vunpack.c.l.b16 %v343
    %v383 = vunpack.c.l.b16 %v344
    %v384 = vunpack.c.l.b16 %v345
    %v385 = vunpack.c.l.b16 %v346
    %v386 = vunpack.c.l.b16 %v347
    %v387 = vunpack.c.l.b16 %v348
    %v388 = vunpack.c.l.b16 %v349
    %v389 = vunpack.c.l.b16 %v350
    %v390 = vunpack.c.l.b16 %v351
    %v391 = vunpack.c.l.b16 %v352
    %v392 = vunpack.c.l.b16 %v353
    %v393 = vpack.c.b16 %v378, %v377
    %v394 = vpack.c.b16 %v380, %v379
    %v395 = vpack.c.b16 %v382, %v381
    %v396 = vpack.c.b16 %v384, %v383
    %v397 = vpack.c.b16 %v386, %v385
    %v398 = vpack.c.b16 %v388, %v387
    %v399 = vpack.c.b16 %v390, %v389
    %v400 = vpack.c.b16 %v392, %v391
    %409 = vmatprep.subr.bf16.mxu0 0
    %410 = vmatpush1.bf16.msra.mxu0 %v400
    %411 = vmatprep.subr.bf16.mxu0 0
    %412 = vmatpush1.bf16.msra.mxu0 %v399
    %413 = vmatprep.subr.bf16.mxu0 0
    %414 = vmatpush1.bf16.msra.mxu0 %v398
    %415 = vmatprep.subr.bf16.mxu0 0
    %416 = vmatpush1.bf16.msra.mxu0 %v397
    %417 = vmatprep.subr.bf16.mxu0 0
    %418 = vmatpush1.bf16.msra.mxu0 %v396
    %419 = vmatprep.subr.bf16.mxu0 0
    %420 = vmatpush1.bf16.msra.mxu0 %v395
    %421 = vmatprep.subr.bf16.mxu0 0
    %422 = vmatpush1.bf16.msra.mxu0 %v394
    %423 = vmatprep.subr.bf16.mxu0 0
    %424 = vmatpush1.bf16.msra.mxu0 %v393
    %425 = vmatprep.subr.bf16.mxu0 0
    %426 = vmatpush2.bf16.msra.mxu0 0
    %427 = vmatprep.subr.bf16.mxu0 0
    %428 = vmatpush2.bf16.msra.mxu0 0
    %429 = vmatprep.subr.bf16.mxu0 0
    %430 = vmatpush2.bf16.msra.mxu0 0
    %431 = vmatprep.subr.bf16.mxu0 0
    %432 = vmatpush2.bf16.msra.mxu0 0
    %433 = vmatprep.subr.bf16.mxu0 0
    %434 = vmatpush2.bf16.msra.mxu0 0
    %435 = vmatprep.subr.bf16.mxu0 0
    %436 = vmatpush2.bf16.msra.mxu0 0
    %437 = vmatprep.subr.bf16.mxu0 0
    %438 = vmatpush2.bf16.msra.mxu0 0
    %439 = vmatprep.subr.bf16.mxu0 0
    %440 = vmatpush2.bf16.msra.mxu0 0
    %441 = vmatprep.mubr.bf16.mxu0 0
    %442 = vmatmul.mubr.bf16.gmra.mxu0 %v337
    %v443 = vpop.f32.mrf.mxu0
    %v444 = vadd.f32 %v359, %v443
    %v445 = vpop.f32.mrf.mxu0
    %v446 = vpop.f32.mrf.mxu0
    %v447 = vadd.f32 %v359, %v446
    %v448 = vpop.f32.mrf.mxu0
    %449 = vdwg.mxu0
    %450 = vst [vmem:[#allocation10] sm:$0xff] %v444
    %451 = vst [vmem:[#allocation10 + $0x8] sm:$0xff] %v447
    // Predicated region
    $region54: #{tpu_custom_call.1} parent=1 // pred_check
      _
    $region55: #{tpu_custom_call.1} parent=1 // pred_check_branch
      %453 = sbr.rel (0) target = $region57
    $region56: #{tpu_custom_call.1} parent=1 // pred_region
      %s455 = ssub.s32 256, 256
      %456 = vsyncadd [#allocation4], %s455
      %s457 = sshll.u32 [#allocation10], 4
      %s458 = int_to_ptr.vmem [resolvable:$true] %s457
      %463 = dma.vmem_to_hbm [thread:$0]  %s458, 256, %s9, [#allocation4], 128, 128, 8
    $region57: #{tpu_custom_call.1} parent=1 // pred_fallthru
      _
    // Predicated region
    $region58: #{tpu_custom_call.1} parent=1 // pred_check
      _
    $region59: #{tpu_custom_call.1} parent=1 // pred_check_branch
      %465 = sbr.rel (0) target = $region61
    $region60: #{tpu_custom_call.1} parent=1 // pred_region
      %466 = dma.done [#allocation4], 256
    $region61: #{tpu_custom_call.1} parent=1 // pred_fallthru
      _
    %467 = vsyncpa [#allocation3], 1
    %468 = vsyncpa [#allocation6], 1
    %469 = vsyncpa [#allocation9], 1
    %470 = vsyncpa [#allocation4], 1

</llo_original>
